<compile_context>
chip_gen: v5e
topology: v5e:2x2
jax: 0.10.0
libtpu: 0.0.40
codegen_flags: <defaults>
</compile_context>

<pallas_src>
import functools

import jax
import jax.numpy as jnp
from jax import lax
from jax.experimental import pallas as pl
from jax.experimental.pallas import tpu as pltpu

EPS = 1e-5  # nn.InstanceNorm2d default (affine=False, eps=1e-5)


@functools.lru_cache(maxsize=None)
def _roll_matches_jnp() -> bool:
    """pltpu.roll is documented to follow jnp.roll (out[i] = x[i - shift]).

    The tap construction below only needs to know which of the two +/- shift
    rotations is which; this one-off 4 KiB probe pins the convention at
    runtime so the kernel stays correct across Mosaic versions.
    """
    def probe(x_ref, o_ref):
        o_ref[...] = pltpu.roll(x_ref[...], 1, 1)

    x = jnp.broadcast_to(jnp.arange(128, dtype=jnp.float32), (8, 128))
    y = pl.pallas_call(
        probe, out_shape=jax.ShapeDtypeStruct((8, 128), jnp.float32))(x)
    return bool(y[0, 1] == 0.0)


# --------------------------- fused Pallas kernel ------------------------------

def _fused_residual_kernel(x_ref, col_ref, w1_ref, w2_ref, o_ref, *,
                           W, mxu_dtype, roll_fwd):
    """One batch element: out = x + IN(conv2(relu(IN(conv1(x))))).

    x_ref  : (C, H*W) f32        image; channels on sublanes, flat H*W on lanes
    col_ref: (1, H*W) int32      column index (w) of every lane position
    w*_ref : (9, C, C) mxu_dtype conv taps, index k = ky*3 + kx, layout (out, in)
    o_ref  : (C, H*W) f32
    """
    C, HW = x_ref.shape
    x = x_ref[...]

    # Border masks for the reflect-padding fixups (shared by both convs).
    lane = lax.broadcasted_iota(jnp.int32, (C, HW), 1)
    col = jnp.broadcast_to(col_ref[...], (C, HW))
    is_top = lane < W                 # row h == 0
    is_bot = lane >= HW - W           # row h == H-1
    is_left = col == 0                # col w == 0
    is_right = col == W - 1           # col w == W-1

    def lane_shift(v, delta):
        # s[i] = v[i + delta]; wrap-around values only land on border
        # rows/cols, where the reflect selects below discard them.
        amt = (-delta) % HW if roll_fwd else delta % HW
        return pltpu.roll(v, amt, 1)

    def conv_instancenorm(img, w_ref):
        # Row-shifted variants r(h + oy), oy in (-1, 0, +1), reflect pad=1.
        up = lane_shift(img, -W)      # row h-1 (interior)
        dn = lane_shift(img, +W)      # row h+1 (interior)
        rows = (jnp.where(is_top, dn, up),    # ky = 0  (oy = -1): reflect row 1
                img,                           # ky = 1
                jnp.where(is_bot, up, dn))     # ky = 2  (oy = +1): reflect row H-2

        acc = jnp.zeros((C, HW), jnp.float32)
        for ky in range(3):
            a = rows[ky]
            lf = lane_shift(a, -1)    # col w-1 (interior)
            rt = lane_shift(a, +1)    # col w+1 (interior)
            cols = (jnp.where(is_left, rt, lf),   # kx = 0  (ox = -1)
                    a,                             # kx = 1
                    jnp.where(is_right, lf, rt))   # kx = 2  (ox = +1)
            for kx in range(3):
                acc += jnp.dot(w_ref[ky * 3 + kx],
                               cols[kx].astype(mxu_dtype),
                               preferred_element_type=jnp.float32)

        # Single-pass InstanceNorm (affine=False): var = E[y^2] - mean^2.
        inv_hw = 1.0 / HW
        mean = jnp.sum(acc, axis=1, keepdims=True) * inv_hw
        ex2 = jnp.sum(acc * acc, axis=1, keepdims=True) * inv_hw
        var = ex2 - mean * mean
        return (acc - mean) * lax.rsqrt(var + EPS)

    y1 = jnp.maximum(conv_instancenorm(x, w1_ref), 0.0)   # never leaves VMEM
    o_ref[...] = x + conv_instancenorm(y1, w2_ref)


# --------------------------- JAX wrapper --------------------------------------

def residual_block(x, w1, b1, w2, b2, *, mxu_dtype=jnp.bfloat16):
    """Forward pass of ResidualBlock.  x: (B, C, H, W) float32, NCHW.

    b1/b2 are accepted for interface parity with nn.Conv2d(..., bias=True) but
    are unused: a per-channel bias added right before an affine=False
    InstanceNorm cancels exactly (shifts the mean, leaves the variance alone).
    """
    del b1, b2
    B, C, H, W = x.shape
    HW = H * W

    # (O, I, 3, 3) -> (9, O, I): tap k = ky*3 + kx, cast once for the MXU.
    def taps(w):
        return jnp.transpose(w, (2, 3, 0, 1)).reshape(9, C, C).astype(mxu_dtype)

    x_flat = x.reshape(B, C, HW).astype(jnp.float32)          # free relabel
    col_idx = jnp.tile(jnp.arange(W, dtype=jnp.int32), H)[None, :]  # (1, HW)

    kernel = functools.partial(
        _fused_residual_kernel, W=W, mxu_dtype=mxu_dtype,
        roll_fwd=_roll_matches_jnp())

    out = pl.pallas_call(
        kernel,
        out_shape=jax.ShapeDtypeStruct((B, C, HW), jnp.float32),
        grid_spec=pltpu.PrefetchScalarGridSpec(
            num_scalar_prefetch=0,
            grid=(B,),
            in_specs=[
                pl.BlockSpec((pl.Squeezed(), C, HW), lambda b: (b, 0, 0)),
                pl.BlockSpec((1, HW), lambda b: (0, 0)),
                pl.BlockSpec((9, C, C), lambda b: (0, 0, 0)),
                pl.BlockSpec((9, C, C), lambda b: (0, 0, 0)),
            ],
            out_specs=pl.BlockSpec((pl.Squeezed(), C, HW), lambda b: (b, 0, 0)),
        ),
        compiler_params=pltpu.CompilerParams(
            dimension_semantics=("parallel",)),
    )(x_flat, col_idx, taps(w1), taps(w2))
    # NOTE: per-grid-step VMEM is only a handful of f32 (C, H*W) slabs.  For
    # very large C*H*W (v7x 64 MiB VMEM) this kernel would need an H-tiled
    # grid with halo rows + two-pass InstanceNorm; unnecessary at these sizes.
    return out.reshape(B, C, H, W)


# --------------------------- pure-JAX reference --------------------------------

def _ref_forward(x, w1, b1, w2, b2):
    def conv_in(h, w, b):
        hp = jnp.pad(h, ((0, 0), (0, 0), (1, 1), (1, 1)), mode="reflect")
        y = lax.conv_general_dilated(
            hp, w, (1, 1), "VALID",
            dimension_numbers=("NCHW", "OIHW", "NCHW"))
        y = y + b[None, :, None, None]
        mean = y.mean(axis=(2, 3), keepdims=True)
        var = ((y - mean) ** 2).mean(axis=(2, 3), keepdims=True)
        return (y - mean) * lax.rsqrt(var + EPS)

    h = jnp.maximum(conv_in(x, w1, b1), 0.0)
    return x + conv_in(h, w2, b2)


# --------------------------- main ----------------------------------------------

if __name__ == "__main__":
    B, C, H, W = 2, 4, 16, 16
    key = jax.random.PRNGKey(0)
    kx, kw1, kb1, kw2, kb2 = jax.random.split(key, 5)

    x = jax.random.normal(kx, (B, C, H, W), dtype=jnp.float32)

    # Deterministic parameter init (shapes from nn.Conv2d(C, C, 3), bias=True).
    fan_in = C * 3 * 3
    scale = 1.0 / jnp.sqrt(jnp.float32(fan_in))
    w1 = jax.random.uniform(kw1, (C, C, 3, 3), jnp.float32, -scale, scale)
    b1 = jax.random.uniform(kb1, (C,), jnp.float32, -scale, scale)
    w2 = jax.random.uniform(kw2, (C, C, 3, 3), jnp.float32, -scale, scale)
    b2 = jax.random.uniform(kb2, (C,), jnp.float32, -scale, scale)

    ref = jax.block_until_ready(_ref_forward(x, w1, b1, w2, b2))

    # f32-MXU path: tight check of the in-kernel taps / reflect fixups /
    # single-pass InstanceNorm / fusion against the XLA reference.
    out_f32 = jax.block_until_ready(
        residual_block(x, w1, b1, w2, b2, mxu_dtype=jnp.float32))
    assert out_f32.shape == (B, C, H, W)
    err_f32 = float(jnp.max(jnp.abs(out_f32 - ref)))
    assert jnp.allclose(out_f32, ref, atol=2e-4, rtol=2e-4), err_f32

    # Default path (bf16 MXU operands, f32 accumulation): looser tolerance.
    out = jax.block_until_ready(residual_block(x, w1, b1, w2, b2))
    err_bf16 = float(jnp.max(jnp.abs(out - ref)))
    assert jnp.allclose(out, ref, atol=5e-2, rtol=5e-2), err_bf16

    print("KERNEL_OK")
</pallas_src>

<mosaic_0001>
module attributes {stable_mosaic.version = 11 : i64} {
  func.func @probe(%arg0: memref<8x128xf32, #tpu.memory_space<vmem>>, %arg1: memref<8x128xf32, #tpu.memory_space<vmem>>) attributes {dimension_semantics = [], scalar_prefetch = 0 : i64, scratch_operands = 0 : i64, tpu.core_type = #tpu.core_type<tc>} {
    %c0 = arith.constant 0 : index
    %c0_0 = arith.constant 0 : index
    %0 = vector.load %arg0[%c0, %c0_0] : memref<8x128xf32, #tpu.memory_space<vmem>>, vector<8x128xf32>
    %c1_i32 = arith.constant 1 : i32
    %1 = tpu.dynamic_rotate %0 by %c1_i32 dim 1 : vector<8x128xf32>, i32 -> vector<8x128xf32>
    %c0_1 = arith.constant 0 : index
    %c0_2 = arith.constant 0 : index
    %2 = vector.load %arg1[%c0_1, %c0_2] : memref<8x128xf32, #tpu.memory_space<vmem>>, vector<8x128xf32>
    tpu.vector_store %arg1[%c0_1, %c0_2], %1 {strides = array<i32>} : memref<8x128xf32, #tpu.memory_space<vmem>>, vector<8x128xf32>,
    return
  }
}

</mosaic_0001>

<llo_original>
// kernel: tpu_custom_call.1
$region0: #{tpu_custom_call.1}
  #allocation0 [shape = 'u32[]', space=smem, size = 0x4, offset = 0x4, fixed_abs, tag = 'smem constant byte address 0x4 - core index']
  #allocation1 [shape = 'u32[72,128]{1,0:T(1,128)}', space=vmem, size = 0x9000, scoped, tag = 'internal scratch']
  %s0 = inlined_call_operand.hbm [shape: f32[8,128], index: 0, kind: input, shape index: {}]
  %s1 = inlined_call_operand.hbm [shape: f32[8,128], index: 1, kind: output, shape index: {}]
  %s2 = sld [smem:[#allocation0]]
  $region18: #{tpu_custom_call.1} parent=0
    _
  %s4 = ssub.s32 1, %s2
  %s5 = scalar_select 0, %s4, %s2
  $region1: #{tpu_custom_call.1} parent=0
    #allocation2 [shape = 'u8[4096]{0}', space=vmem, size = 0x1000, scoped, tag = 'input window, operand 0, single buffered']
    #allocation3 [shape = 's32[1]{0}', space=sflag, size = 0x4, scoped, tag = 'scoped memory for tpu_custom_call.1']
    #allocation4 [shape = 's32[1]{0}', space=sflag, size = 0x4, scoped, tag = 'scoped memory for tpu_custom_call.1']
    #allocation5 [shape = 'u8[4096]{0}', space=vmem, size = 0x1000, scoped, tag = 'output window, operand 0, single buffered']
    %6 = vsyncpa [#allocation3], 0
    %7 = vsyncpa [#allocation4], 0
    // Predicated region
    $region2: #{tpu_custom_call.1} parent=1 // pred_check
      _
    $region3: #{tpu_custom_call.1} parent=1 // pred_check_branch
      %9 = sbr.rel (0) target = $region5
    $region4: #{tpu_custom_call.1} parent=1 // pred_region
      %11 = vsyncadd [#allocation3], 0
      %s13 = sshll.u32 %s0, 4
      %s14 = int_to_ptr.hbm [resolvable:$true] %s13
      %s15 = sshll.u32 [#allocation2], 4
      %s16 = int_to_ptr.vmem [resolvable:$true] %s15
      %18 = dma.hbm_to_vmem [thread:$0]  %s14, 128, %s16, [#allocation3]
    $region5: #{tpu_custom_call.1} parent=1 // pred_fallthru
      _
    // Predicated region
    $region6: #{tpu_custom_call.1} parent=1 // pred_check
      _
    $region7: #{tpu_custom_call.1} parent=1 // pred_check_branch
      %20 = sbr.rel (0) target = $region9
    $region8: #{tpu_custom_call.1} parent=1 // pred_region
      %22 = dma.done [#allocation3], 128
    $region9: #{tpu_custom_call.1} parent=1 // pred_fallthru
      _
    %v23 = vld [vmem:[#allocation2] sm:$0xff]
    %24 = vrot.lane.b32.xlu0 %v23, 1
    %v25 = vpop.permute.xlu0 %24
    %26 = vst [vmem:[#allocation5] sm:$0xff] %v25
    // Predicated region
    $region10: #{tpu_custom_call.1} parent=1 // pred_check
      _
    $region11: #{tpu_custom_call.1} parent=1 // pred_check_branch
      %28 = sbr.rel (0) target = $region13
    $region12: #{tpu_custom_call.1} parent=1 // pred_region
      %30 = vsyncadd [#allocation4], 0
      %s32 = sshll.u32 [#allocation5], 4
      %s33 = int_to_ptr.vmem [resolvable:$true] %s32
      %s34 = sshll.u32 %s1, 4
      %s35 = int_to_ptr.hbm [resolvable:$true] %s34
      %37 = dma.vmem_to_hbm [thread:$0]  %s33, 128, %s35, [#allocation4]
    $region13: #{tpu_custom_call.1} parent=1 // pred_fallthru
      _
    // Predicated region
    $region14: #{tpu_custom_call.1} parent=1 // pred_check
      _
    $region15: #{tpu_custom_call.1} parent=1 // pred_check_branch
      %39 = sbr.rel (0) target = $region17
    $region16: #{tpu_custom_call.1} parent=1 // pred_region
      %41 = dma.done [#allocation4], 128
    $region17: #{tpu_custom_call.1} parent=1 // pred_fallthru
      _
    %42 = vsyncpa [#allocation3], 1
    %43 = vsyncpa [#allocation4], 1

</llo_original>
